<compile_context>
chip_gen: v7x
topology: tpu7x:2x2x1
jax: 0.10.0
libtpu: 0.0.40
codegen_flags: <defaults>
</compile_context>

<pallas_src>
import jax
import jax.numpy as jnp
from jax.experimental import pallas as pl
from jax.experimental.pallas import tpu as pltpu

BN_EPS = 1e-5
_LANE = 128
_SUBLANE = 8


def _round_up(n, m):
    return ((n + m - 1) // m) * m


def _mlp_kernel(x_ref,
                w1_ref, b1_ref,
                w2_ref, b2_ref,
                w3_ref, b3_ref,
                w4_ref, b4_ref,
                o_ref):
    dt = w1_ref.dtype  # matmul input dtype (f32 or bf16); accumulation is f32

    # Linear(input_dim, 64) + ReLU
    h = jnp.dot(x_ref[...], w1_ref[...],
                preferred_element_type=jnp.float32) + b1_ref[...]
    h = jnp.maximum(h, 0.0)

    # BatchNorm1d(64) folded into Linear(64, 64); + ReLU
    h = jnp.dot(h.astype(dt), w2_ref[...],
                preferred_element_type=jnp.float32) + b2_ref[...]
    h = jnp.maximum(h, 0.0)

    # Linear(64, 64) + ReLU
    h = jnp.dot(h.astype(dt), w3_ref[...],
                preferred_element_type=jnp.float32) + b3_ref[...]
    h = jnp.maximum(h, 0.0)

    # Dropout(0.02) -> identity in eval mode

    # Linear(64, num_quantiles_padded) (lane-dense, padded to 128)
    o_ref[...] = (jnp.dot(h.astype(dt), w4_ref[...],
                          preferred_element_type=jnp.float32)
                  + b4_ref[...]).astype(o_ref.dtype)


def fold_params(params, *, weight_dtype=jnp.float32):
    """One-time preparation: fold eval-mode BatchNorm into the 2nd linear
    layer and pad the final layer's output dim to a multiple of 128.
    Call once at load time and reuse the result across forwards."""
    hidden = params["w1"].shape[1]
    num_q = params["w4"].shape[1]

    # Exact eval-mode BN fold: y = relu(x) -> BN -> W2  ==  relu(x) -> W2', b2'
    s = params["gamma"] * jax.lax.rsqrt(params["var"] + BN_EPS)   # (1, hidden)
    t = params["beta"] - params["mean"] * s                        # (1, hidden)
    w2_f = params["w2"] * s.reshape(hidden, 1)
    b2_f = params["b2"] + t @ params["w2"]

    # Lane-pad the output projection so stores are full unmasked vst.
    q_pad = _round_up(max(num_q, _LANE), _LANE)
    w4_p = jnp.zeros((hidden, q_pad), jnp.float32).at[:, :num_q].set(params["w4"])
    b4_p = jnp.zeros((1, q_pad), jnp.float32).at[:, :num_q].set(params["b4"])

    wd = weight_dtype
    return {
        "w1": params["w1"].astype(wd), "b1": params["b1"].astype(jnp.float32),
        "w2": w2_f.astype(wd),         "b2": b2_f.astype(jnp.float32),
        "w3": params["w3"].astype(wd), "b3": params["b3"].astype(jnp.float32),
        "w4": w4_p.astype(wd),         "b4": b4_p.astype(jnp.float32),
    }


def multi_quantile_forward(x, folded, num_quantiles, *,
                           tile_b=4096, slice_output=True):
    """x: (B, input_dim) float32 ; folded: output of fold_params()."""
    B, input_dim = x.shape
    hidden = folded["w1"].shape[1]
    q_pad = folded["w4"].shape[1]

    # ---- Batch tile selection.
    #  * default 4096 rows: amortizes the ~0.35 us/grid-step overhead while
    #    staying far under even v5e's 16 MiB default scoped-VMEM budget.
    #  * for small/medium batches, split into >= 2 tiles so the "parallel"
    #    axis can shard across v7x's two TensorCores.
    #  * ragged last block is handled by Pallas (masked edge stores), so no
    #    jnp.pad of x and no wasted rows.
    tile_b = int(tile_b)
    if B <= 2 * tile_b:
        tile_b = _round_up(max(1, (B + 1) // 2), _SUBLANE)
    tile_b = min(tile_b, _round_up(B, _SUBLANE))
    n_tiles = -(-B // tile_b)

    x_in = x.astype(folded["w1"].dtype)
    args = (
        x_in,
        folded["w1"], folded["b1"],
        folded["w2"], folded["b2"],
        folded["w3"], folded["b3"],
        folded["w4"], folded["b4"],
    )

    # x tiled along batch; parameters broadcast (constant index_map -> stay
    # VMEM-resident across grid steps).  ndim captured by value.
    in_specs = [pl.BlockSpec((tile_b, input_dim), lambda i: (i, 0))]
    for a in args[1:]:
        in_specs.append(pl.BlockSpec(a.shape, lambda i, _nd=a.ndim: (0,) * _nd))
    out_spec = pl.BlockSpec((tile_b, q_pad), lambda i: (i, 0))

    # Advisory cost estimate for XLA scheduling.
    flops = 2 * B * (input_dim * hidden + 2 * hidden * hidden + hidden * q_pad)
    x_item = jnp.dtype(x_in.dtype).itemsize
    param_bytes = sum(int(a.size) * jnp.dtype(a.dtype).itemsize for a in args[1:])
    bytes_accessed = B * input_dim * x_item + B * q_pad * 4 + param_bytes

    # VMEM headroom hint only needed for very large tiles (v5e default scoped
    # limit is 16 MiB; v6e/v7x default 32 MiB).
    vmem_est = 2 * (tile_b * input_dim * x_item + tile_b * q_pad * 4) + 2 * param_bytes
    vmem_limit = None
    if vmem_est > 12 * 1024 * 1024:
        vmem_limit = min(_round_up(int(vmem_est * 1.25), 1 << 20), 48 << 20)

    out_padded = pl.pallas_call(
        _mlp_kernel,
        out_shape=jax.ShapeDtypeStruct((B, q_pad), jnp.float32),
        grid=(n_tiles,),
        in_specs=in_specs,
        out_specs=out_spec,
        compiler_params=pltpu.CompilerParams(
            dimension_semantics=("parallel",),
            vmem_limit_bytes=vmem_limit),
        cost_estimate=pl.CostEstimate(
            flops=flops, transcendentals=0, bytes_accessed=bytes_accessed),
    )(*args)

    if slice_output:
        return out_padded[:, :num_quantiles]
    return out_padded  # (B, q_pad): downstream may consume the padded slab


def init_params(key, input_dim, num_quantiles=99, hidden=64):
    """Deterministic synthetic parameter init (PyTorch-like uniform fan-in bounds)."""
    ks = jax.random.split(key, 12)

    def lin(kw, kb, fan_in, fan_out):
        bound = 1.0 / jnp.sqrt(fan_in)
        w = jax.random.uniform(kw, (fan_in, fan_out), jnp.float32, -bound, bound)
        b = jax.random.uniform(kb, (1, fan_out), jnp.float32, -bound, bound)
        return w, b

    w1, b1 = lin(ks[0], ks[1], input_dim, hidden)
    w2, b2 = lin(ks[2], ks[3], hidden, hidden)
    w3, b3 = lin(ks[4], ks[5], hidden, hidden)
    w4, b4 = lin(ks[6], ks[7], hidden, num_quantiles)

    # BatchNorm1d(64): affine params + running stats (deterministic, non-trivial).
    gamma = 1.0 + 0.1 * jax.random.normal(ks[8], (1, hidden), jnp.float32)
    beta = 0.1 * jax.random.normal(ks[9], (1, hidden), jnp.float32)
    mean = 0.05 * jax.random.normal(ks[10], (1, hidden), jnp.float32)
    var = jnp.abs(1.0 + 0.1 * jax.random.normal(ks[11], (1, hidden), jnp.float32))

    return {
        "w1": w1, "b1": b1,
        "gamma": gamma, "beta": beta, "mean": mean, "var": var,
        "w2": w2, "b2": b2,
        "w3": w3, "b3": b3,
        "w4": w4, "b4": b4,
    }


def _reference_forward(x, p):
    """Pure-JAX reference (eval-mode, un-folded BN), for correctness check."""
    h = jnp.maximum(x @ p["w1"] + p["b1"], 0.0)
    h = (h - p["mean"]) / jnp.sqrt(p["var"] + BN_EPS) * p["gamma"] + p["beta"]
    h = jnp.maximum(h @ p["w2"] + p["b2"], 0.0)
    h = jnp.maximum(h @ p["w3"] + p["b3"], 0.0)
    return h @ p["w4"] + p["b4"]


if __name__ == "__main__":
    key = jax.random.PRNGKey(0)
    k_x, k_p = jax.random.split(key)

    B, INPUT_DIM, NUM_Q = 8, 16, 99
    x = jax.random.normal(k_x, (B, INPUT_DIM), jnp.float32)
    params = init_params(k_p, INPUT_DIM, NUM_Q)

    # One-time parameter preparation (done outside the forward hot path).
    folded = fold_params(params)

    out = multi_quantile_forward(x, folded, NUM_Q)
    out = jax.block_until_ready(out)

    ref = _reference_forward(x, params)
    assert out.shape == (B, NUM_Q), out.shape
    assert jnp.allclose(out, ref, atol=1e-4, rtol=1e-4), "mismatch vs reference"

    print("KERNEL_OK")
</pallas_src>

<mosaic_0001>
module attributes {stable_mosaic.version = 11 : i64} {
  func.func @_mlp_kernel(%arg0: i32, %arg1: memref<8x16xf32, #tpu.memory_space<vmem>>, %arg2: memref<16x64xf32, #tpu.memory_space<vmem>>, %arg3: memref<1x64xf32, #tpu.memory_space<vmem>>, %arg4: memref<64x64xf32, #tpu.memory_space<vmem>>, %arg5: memref<1x64xf32, #tpu.memory_space<vmem>>, %arg6: memref<64x64xf32, #tpu.memory_space<vmem>>, %arg7: memref<1x64xf32, #tpu.memory_space<vmem>>, %arg8: memref<64x128xf32, #tpu.memory_space<vmem>>, %arg9: memref<1x128xf32, #tpu.memory_space<vmem>>, %arg10: memref<8x128xf32, #tpu.memory_space<vmem>>) attributes {dimension_semantics = [#tpu.dimension_semantics<parallel>], iteration_bounds = array<i64: 1>, scalar_prefetch = 0 : i64, scratch_operands = 0 : i64, tpu.core_type = #tpu.core_type<tc>, window_params = [{transform_indices = @transform_0, window_bounds = array<i64: 8, 16>}, {pipeline_mode = #tpu.pipeline_mode<synchronous>, transform_indices = @transform_1, window_bounds = array<i64: 16, 64>}, {pipeline_mode = #tpu.pipeline_mode<synchronous>, transform_indices = @transform_2, window_bounds = array<i64: 1, 64>}, {pipeline_mode = #tpu.pipeline_mode<synchronous>, transform_indices = @transform_3, window_bounds = array<i64: 64, 64>}, {pipeline_mode = #tpu.pipeline_mode<synchronous>, transform_indices = @transform_4, window_bounds = array<i64: 1, 64>}, {pipeline_mode = #tpu.pipeline_mode<synchronous>, transform_indices = @transform_5, window_bounds = array<i64: 64, 64>}, {pipeline_mode = #tpu.pipeline_mode<synchronous>, transform_indices = @transform_6, window_bounds = array<i64: 1, 64>}, {pipeline_mode = #tpu.pipeline_mode<synchronous>, transform_indices = @transform_7, window_bounds = array<i64: 64, 128>}, {pipeline_mode = #tpu.pipeline_mode<synchronous>, transform_indices = @transform_8, window_bounds = array<i64: 1, 128>}, {transform_indices = @transform_9, window_bounds = array<i64: 8, 128>}]} {
    %c0 = arith.constant 0 : index
    %c0_0 = arith.constant 0 : index
    %0 = vector.load %arg1[%c0, %c0_0] : memref<8x16xf32, #tpu.memory_space<vmem>>, vector<8x16xf32>
    %c0_1 = arith.constant 0 : index
    %c0_2 = arith.constant 0 : index
    %1 = vector.load %arg2[%c0_1, %c0_2] : memref<16x64xf32, #tpu.memory_space<vmem>>, vector<16x64xf32>
    %cst = arith.constant dense<0.000000e+00> : vector<8x64xf32>
    %2 = tpu.matmul %0, %1, %cst {dimension_numbers = #tpu.dot_dimension_numbers<[1], [0], [0], [1], [0, 0, 1, 1], [], []>} : vector<8x16xf32>, vector<16x64xf32>, vector<8x64xf32> -> vector<8x64xf32>
    %c0_3 = arith.constant 0 : index
    %c0_4 = arith.constant 0 : index
    %3 = vector.load %arg3[%c0_3, %c0_4] : memref<1x64xf32, #tpu.memory_space<vmem>>, vector<1x64xf32>
    %4 = vector.broadcast %3 : vector<1x64xf32> to vector<8x64xf32>
    %5 = arith.addf %2, %4 : vector<8x64xf32>
    %cst_5 = arith.constant 0.000000e+00 : f32
    %6 = vector.broadcast %cst_5 : f32 to vector<8x64xf32>
    %7 = arith.maximumf %5, %6 : vector<8x64xf32>
    %c0_6 = arith.constant 0 : index
    %c0_7 = arith.constant 0 : index
    %8 = vector.load %arg4[%c0_6, %c0_7] : memref<64x64xf32, #tpu.memory_space<vmem>>, vector<64x64xf32>
    %cst_8 = arith.constant dense<0.000000e+00> : vector<8x64xf32>
    %9 = tpu.matmul %7, %8, %cst_8 {dimension_numbers = #tpu.dot_dimension_numbers<[1], [0], [0], [1], [0, 0, 1, 1], [], []>} : vector<8x64xf32>, vector<64x64xf32>, vector<8x64xf32> -> vector<8x64xf32>
    %c0_9 = arith.constant 0 : index
    %c0_10 = arith.constant 0 : index
    %10 = vector.load %arg5[%c0_9, %c0_10] : memref<1x64xf32, #tpu.memory_space<vmem>>, vector<1x64xf32>
    %11 = vector.broadcast %10 : vector<1x64xf32> to vector<8x64xf32>
    %12 = arith.addf %9, %11 : vector<8x64xf32>
    %cst_11 = arith.constant 0.000000e+00 : f32
    %13 = vector.broadcast %cst_11 : f32 to vector<8x64xf32>
    %14 = arith.maximumf %12, %13 : vector<8x64xf32>
    %c0_12 = arith.constant 0 : index
    %c0_13 = arith.constant 0 : index
    %15 = vector.load %arg6[%c0_12, %c0_13] : memref<64x64xf32, #tpu.memory_space<vmem>>, vector<64x64xf32>
    %cst_14 = arith.constant dense<0.000000e+00> : vector<8x64xf32>
    %16 = tpu.matmul %14, %15, %cst_14 {dimension_numbers = #tpu.dot_dimension_numbers<[1], [0], [0], [1], [0, 0, 1, 1], [], []>} : vector<8x64xf32>, vector<64x64xf32>, vector<8x64xf32> -> vector<8x64xf32>
    %c0_15 = arith.constant 0 : index
    %c0_16 = arith.constant 0 : index
    %17 = vector.load %arg7[%c0_15, %c0_16] : memref<1x64xf32, #tpu.memory_space<vmem>>, vector<1x64xf32>
    %18 = vector.broadcast %17 : vector<1x64xf32> to vector<8x64xf32>
    %19 = arith.addf %16, %18 : vector<8x64xf32>
    %cst_17 = arith.constant 0.000000e+00 : f32
    %20 = vector.broadcast %cst_17 : f32 to vector<8x64xf32>
    %21 = arith.maximumf %19, %20 : vector<8x64xf32>
    %c0_18 = arith.constant 0 : index
    %c0_19 = arith.constant 0 : index
    %22 = vector.load %arg8[%c0_18, %c0_19] : memref<64x128xf32, #tpu.memory_space<vmem>>, vector<64x128xf32>
    %cst_20 = arith.constant dense<0.000000e+00> : vector<8x128xf32>
    %23 = tpu.matmul %21, %22, %cst_20 {dimension_numbers = #tpu.dot_dimension_numbers<[1], [0], [0], [1], [0, 0, 1, 1], [], []>} : vector<8x64xf32>, vector<64x128xf32>, vector<8x128xf32> -> vector<8x128xf32>
    %c0_21 = arith.constant 0 : index
    %c0_22 = arith.constant 0 : index
    %24 = vector.load %arg9[%c0_21, %c0_22] : memref<1x128xf32, #tpu.memory_space<vmem>>, vector<1x128xf32>
    %25 = vector.broadcast %24 : vector<1x128xf32> to vector<8x128xf32>
    %26 = arith.addf %23, %25 : vector<8x128xf32>
    %c0_23 = arith.constant 0 : index
    %c0_24 = arith.constant 0 : index
    %27 = vector.load %arg10[%c0_23, %c0_24] : memref<8x128xf32, #tpu.memory_space<vmem>>, vector<8x128xf32>
    tpu.vector_store %arg10[%c0_23, %c0_24], %26 {strides = array<i32>} : memref<8x128xf32, #tpu.memory_space<vmem>>, vector<8x128xf32>,
    return
  }
  func.func @transform_0(%arg0: i32) -> (i32, i32) {
    %c0_i32 = arith.constant 0 : i32
    %c0_i32_0 = arith.constant 0 : i32
    return %arg0, %c0_i32 : i32, i32
  }
  func.func @transform_1(%arg0: i32) -> (i32, i32) {
    %c0_i32 = arith.constant 0 : i32
    %c0_i32_0 = arith.constant 0 : i32
    %c0_i32_1 = arith.constant 0 : i32
    return %c0_i32, %c0_i32_0 : i32, i32
  }
  func.func @transform_2(%arg0: i32) -> (i32, i32) {
    %c0_i32 = arith.constant 0 : i32
    %c0_i32_0 = arith.constant 0 : i32
    %c0_i32_1 = arith.constant 0 : i32
    return %c0_i32, %c0_i32_0 : i32, i32
  }
  func.func @transform_3(%arg0: i32) -> (i32, i32) {
    %c0_i32 = arith.constant 0 : i32
    %c0_i32_0 = arith.constant 0 : i32
    %c0_i32_1 = arith.constant 0 : i32
    return %c0_i32, %c0_i32_0 : i32, i32
  }
  func.func @transform_4(%arg0: i32) -> (i32, i32) {
    %c0_i32 = arith.constant 0 : i32
    %c0_i32_0 = arith.constant 0 : i32
    %c0_i32_1 = arith.constant 0 : i32
    return %c0_i32, %c0_i32_0 : i32, i32
  }
  func.func @transform_5(%arg0: i32) -> (i32, i32) {
    %c0_i32 = arith.constant 0 : i32
    %c0_i32_0 = arith.constant 0 : i32
    %c0_i32_1 = arith.constant 0 : i32
    return %c0_i32, %c0_i32_0 : i32, i32
  }
  func.func @transform_6(%arg0: i32) -> (i32, i32) {
    %c0_i32 = arith.constant 0 : i32
    %c0_i32_0 = arith.constant 0 : i32
    %c0_i32_1 = arith.constant 0 : i32
    return %c0_i32, %c0_i32_0 : i32, i32
  }
  func.func @transform_7(%arg0: i32) -> (i32, i32) {
    %c0_i32 = arith.constant 0 : i32
    %c0_i32_0 = arith.constant 0 : i32
    %c0_i32_1 = arith.constant 0 : i32
    return %c0_i32, %c0_i32_0 : i32, i32
  }
  func.func @transform_8(%arg0: i32) -> (i32, i32) {
    %c0_i32 = arith.constant 0 : i32
    %c0_i32_0 = arith.constant 0 : i32
    %c0_i32_1 = arith.constant 0 : i32
    return %c0_i32, %c0_i32_0 : i32, i32
  }
  func.func @transform_9(%arg0: i32) -> (i32, i32) {
    %c0_i32 = arith.constant 0 : i32
    %c0_i32_0 = arith.constant 0 : i32
    return %arg0, %c0_i32 : i32, i32
  }
}

</mosaic_0001>

<llo_original>
// kernel: tpu_custom_call.1
$region0: #{tpu_custom_call.1}
  #allocation0 [shape = 'u32[]', space=smem, size = 0x4, offset = 0x4, fixed_abs, tag = 'smem constant byte address 0x4 - core index']
  #allocation1 [shape = 'u32[144,128]{1,0:T(1,128)}', space=vmem, size = 0x12000, scoped, tag = 'internal scratch']
  %s0 = inlined_call_operand.hbm [shape: f32[8,16], index: 0, kind: input, shape index: {}]
  %s1 = inlined_call_operand.hbm [shape: f32[16,64], index: 1, kind: input, shape index: {}]
  %s2 = inlined_call_operand.vmem [shape: f32[1,64], index: 2, kind: input, shape index: {}]
  %s3 = inlined_call_operand.hbm [shape: f32[64,64], index: 3, kind: input, shape index: {}]
  %s4 = inlined_call_operand.vmem [shape: f32[1,64], index: 4, kind: input, shape index: {}]
  %s5 = inlined_call_operand.hbm [shape: f32[64,64], index: 5, kind: input, shape index: {}]
  %s6 = inlined_call_operand.vmem [shape: f32[1,64], index: 6, kind: input, shape index: {}]
  %s7 = inlined_call_operand.hbm [shape: f32[64,128], index: 7, kind: input, shape index: {}]
  %s8 = inlined_call_operand.vmem [shape: f32[1,128], index: 8, kind: input, shape index: {}]
  %s9 = inlined_call_operand.hbm [shape: f32[8,128], index: 9, kind: output, shape index: {}]
  %s10 = sld [smem:[#allocation0]]
  $region66: #{tpu_custom_call.1} parent=0
    _
  %s12 = ssub.s32 1, %s10
  %s13 = scalar_select 0, %s12, %s10
  $region1: #{tpu_custom_call.1} parent=0
    #allocation2 [shape = 'u8[4096]{0}', space=vmem, size = 0x1000, scoped, tag = 'input window, operand 0, single buffered']
    #allocation3 [shape = 's32[1]{0}', space=sflag, size = 0x4, scoped, tag = 'scoped memory for tpu_custom_call.1']
    #allocation4 [shape = 's32[1]{0}', space=sflag, size = 0x4, scoped, tag = 'scoped memory for tpu_custom_call.1']
    #allocation5 [shape = 'u8[8192]{0}', space=vmem, size = 0x2000, scoped, tag = 'input window, operand 1, single buffered']
    #allocation6 [shape = 's32[1]{0}', space=sflag, size = 0x4, scoped, tag = 'scoped memory for tpu_custom_call.1']
    #allocation7 [shape = 'u8[32768]{0}', space=vmem, size = 0x8000, scoped, tag = 'input window, operand 3, single buffered']
    #allocation8 [shape = 'u8[32768]{0}', space=vmem, size = 0x8000, scoped, tag = 'input window, operand 5, single buffered']
    #allocation9 [shape = 's32[1]{0}', space=sflag, size = 0x4, scoped, tag = 'scoped memory for tpu_custom_call.1']
    #allocation10 [shape = 'u8[32768]{0}', space=vmem, size = 0x8000, scoped, tag = 'input window, operand 7, single buffered']
    #allocation11 [shape = 'u8[4096]{0}', space=vmem, size = 0x1000, scoped, tag = 'output window, operand 0, single buffered']
    %14 = vsyncpa [#allocation3], 0
    %15 = vsyncpa [#allocation6], 0
    %16 = vsyncpa [#allocation9], 0
    %17 = vsyncpa [#allocation4], 0
    // Predicated region
    $region2: #{tpu_custom_call.1} parent=1 // pred_check
      _
    $region3: #{tpu_custom_call.1} parent=1 // pred_check_branch
      %19 = sbr.rel (0) target = $region5
    $region4: #{tpu_custom_call.1} parent=1 // pred_region
      %s21 = ssub.s32 128, 128
      %22 = vsyncadd [#allocation3], %s21
      %s24 = sshll.u32 [#allocation2], 4
      %s25 = int_to_ptr.vmem [resolvable:$true] %s24
      %27 = dma.hbm_to_vmem [thread:$0]  %s0, 128, %s25, [#allocation3]
    $region5: #{tpu_custom_call.1} parent=1 // pred_fallthru
      _
    // Predicated region
    $region6: #{tpu_custom_call.1} parent=1 // pred_check
      _
    $region7: #{tpu_custom_call.1} parent=1 // pred_check_branch
      %29 = sbr.rel (0) target = $region9
    $region8: #{tpu_custom_call.1} parent=1 // pred_region
      %s31 = ssub.s32 256, 256
      %32 = vsyncadd [#allocation6], %s31
      %s33 = sshll.u32 [#allocation5], 4
      %s34 = int_to_ptr.vmem [resolvable:$true] %s33
      %39 = dma.hbm_to_vmem [thread:$0]  %s1, 256, %s34, [#allocation6], 128, 128, 8
    $region9: #{tpu_custom_call.1} parent=1 // pred_fallthru
      _
    // Predicated region
    $region10: #{tpu_custom_call.1} parent=1 // pred_check
      _
    $region11: #{tpu_custom_call.1} parent=1 // pred_check_branch
      %41 = sbr.rel (0) target = $region13
    $region12: #{tpu_custom_call.1} parent=1 // pred_region
      _
    $region13: #{tpu_custom_call.1} parent=1 // pred_fallthru
      _
    // Predicated region
    $region14: #{tpu_custom_call.1} parent=1 // pred_check
      _
    $region15: #{tpu_custom_call.1} parent=1 // pred_check_branch
      %43 = sbr.rel (0) target = $region17
    $region16: #{tpu_custom_call.1} parent=1 // pred_region
      %s45 = ssub.s32 1024, 1024
      %46 = vsyncadd [#allocation6], %s45
      %s47 = sshll.u32 [#allocation7], 4
      %s48 = int_to_ptr.vmem [resolvable:$true] %s47
      %53 = dma.hbm_to_vmem [thread:$0]  %s3, 1024, %s48, [#allocation6], 128, 128, 8
    $region17: #{tpu_custom_call.1} parent=1 // pred_fallthru
      _
    // Predicated region
    $region18: #{tpu_custom_call.1} parent=1 // pred_check
      _
    $region19: #{tpu_custom_call.1} parent=1 // pred_check_branch
      %55 = sbr.rel (0) target = $region21
    $region20: #{tpu_custom_call.1} parent=1 // pred_region
      _
    $region21: #{tpu_custom_call.1} parent=1 // pred_fallthru
      _
    // Predicated region
    $region22: #{tpu_custom_call.1} parent=1 // pred_check
      _
    $region23: #{tpu_custom_call.1} parent=1 // pred_check_branch
      %57 = sbr.rel (0) target = $region25
    $region24: #{tpu_custom_call.1} parent=1 // pred_region
      %s59 = ssub.s32 1024, 1024
      %60 = vsyncadd [#allocation9], %s59
      %s61 = sshll.u32 [#allocation8], 4
      %s62 = int_to_ptr.vmem [resolvable:$true] %s61
      %67 = dma.hbm_to_vmem [thread:$0]  %s5, 1024, %s62, [#allocation9], 128, 128, 8
    $region25: #{tpu_custom_call.1} parent=1 // pred_fallthru
      _
    // Predicated region
    $region26: #{tpu_custom_call.1} parent=1 // pred_check
      _
    $region27: #{tpu_custom_call.1} parent=1 // pred_check_branch
      %69 = sbr.rel (0) target = $region29
    $region28: #{tpu_custom_call.1} parent=1 // pred_region
      _
    $region29: #{tpu_custom_call.1} parent=1 // pred_fallthru
      _
    // Predicated region
    $region30: #{tpu_custom_call.1} parent=1 // pred_check
      _
    $region31: #{tpu_custom_call.1} parent=1 // pred_check_branch
      %71 = sbr.rel (0) target = $region33
    $region32: #{tpu_custom_call.1} parent=1 // pred_region
      %s73 = ssub.s32 1024, 1024
      %74 = vsyncadd [#allocation9], %s73
      %s75 = sshll.u32 [#allocation10], 4
      %s76 = int_to_ptr.vmem [resolvable:$true] %s75
      %81 = dma.hbm_to_vmem [thread:$0]  %s7, 1024, %s76, [#allocation9], 128, 128, 8
    $region33: #{tpu_custom_call.1} parent=1 // pred_fallthru
      _
    // Predicated region
    $region34: #{tpu_custom_call.1} parent=1 // pred_check
      _
    $region35: #{tpu_custom_call.1} parent=1 // pred_check_branch
      %83 = sbr.rel (0) target = $region37
    $region36: #{tpu_custom_call.1} parent=1 // pred_region
      _
    $region37: #{tpu_custom_call.1} parent=1 // pred_fallthru
      _
    // Predicated region
    $region38: #{tpu_custom_call.1} parent=1 // pred_check
      _
    $region39: #{tpu_custom_call.1} parent=1 // pred_check_branch
      %85 = sbr.rel (0) target = $region41
    $region40: #{tpu_custom_call.1} parent=1 // pred_region
      %86 = dma.done [#allocation3], 128
    $region41: #{tpu_custom_call.1} parent=1 // pred_fallthru
      _
    // Predicated region
    $region42: #{tpu_custom_call.1} parent=1 // pred_check
      _
    $region43: #{tpu_custom_call.1} parent=1 // pred_check_branch
      %88 = sbr.rel (0) target = $region45
    $region44: #{tpu_custom_call.1} parent=1 // pred_region
      %89 = dma.done [#allocation6], 256
    $region45: #{tpu_custom_call.1} parent=1 // pred_fallthru
      _
    // Predicated region
    $region46: #{tpu_custom_call.1} parent=1 // pred_check
      _
    $region47: #{tpu_custom_call.1} parent=1 // pred_check_branch
      %91 = sbr.rel (0) target = $region49
    $region48: #{tpu_custom_call.1} parent=1 // pred_region
      %92 = dma.done [#allocation6], 1024
    $region49: #{tpu_custom_call.1} parent=1 // pred_fallthru
      _
    // Predicated region
    $region50: #{tpu_custom_call.1} parent=1 // pred_check
      _
    $region51: #{tpu_custom_call.1} parent=1 // pred_check_branch
      %94 = sbr.rel (0) target = $region53
    $region52: #{tpu_custom_call.1} parent=1 // pred_region
      %95 = dma.done [#allocation9], 1024
    $region53: #{tpu_custom_call.1} parent=1 // pred_fallthru
      _
    // Predicated region
    $region54: #{tpu_custom_call.1} parent=1 // pred_check
      _
    $region55: #{tpu_custom_call.1} parent=1 // pred_check_branch
      %97 = sbr.rel (0) target = $region57
    $region56: #{tpu_custom_call.1} parent=1 // pred_region
      %98 = dma.done [#allocation9], 1024
    $region57: #{tpu_custom_call.1} parent=1 // pred_fallthru
      _
    %v99 = vld [vmem:[#allocation2] sm:$0xff]
    %v100 = vld [vmem:[#allocation5] sm:$0xff]
    %v101 = vld [vmem:[#allocation5 + $0x8] sm:$0xff]
    %v102 = vld [vmem:[%s2] sm:$0x1]
    %v104 = vlaneseq
    %v105 = vshrl.u32 %v104, 7
    %v106 = vsub.s32 0, %v105
    %v107 = vrot.slane %v102, %v106
    %vm109 = vcmask 130048
    %v111 = vsel %vm109, %v99, 0
    %113 = vmatprep.subr.mxu0 0.0
    %114 = vmatpush1.msra.mxu0 %v100
    %115 = vmatprep.subr.mxu0 0.0
    %116 = vmatpush1.msra.mxu0 %v101
    %117 = vmatprep.subr.mxu0 0.0
    %118 = vmatpush1.msra.mxu0 0.0
    %119 = vmatprep.subr.mxu0 0.0
    %120 = vmatpush1.msra.mxu0 0.0
    %121 = vmatprep.subr.mxu0 0.0
    %122 = vmatpush1.msra.mxu0 0.0
    %123 = vmatprep.subr.mxu0 0.0
    %124 = vmatpush1.msra.mxu0 0.0
    %125 = vmatprep.subr.mxu0 0.0
    %126 = vmatpush1.msra.mxu0 0.0
    %127 = vmatprep.subr.mxu0 0.0
    %128 = vmatpush1.msra.mxu0 0.0
    %129 = vmatprep.subr.mxu0 0.0
    %130 = vmatpush1.msra.mxu0 0.0
    %131 = vmatprep.subr.mxu0 0.0
    %132 = vmatpush1.msra.mxu0 0.0
    %133 = vmatprep.subr.mxu0 0.0
    %134 = vmatpush1.msra.mxu0 0.0
    %135 = vmatprep.subr.mxu0 0.0
    %136 = vmatpush1.msra.mxu0 0.0
    %137 = vmatprep.subr.mxu0 0.0
    %138 = vmatpush1.msra.mxu0 0.0
    %139 = vmatprep.subr.mxu0 0.0
    %140 = vmatpush1.msra.mxu0 0.0
    %141 = vmatprep.subr.mxu0 0.0
    %142 = vmatpush1.msra.mxu0 0.0
    %143 = vmatprep.subr.mxu0 0.0
    %144 = vmatpush1.msra.mxu0 0.0
    %145 = vmatprep.subr.mxu0 0.0
    %146 = vmatpush1.msra.mxu0 0.0
    %147 = vmatprep.subr.mxu0 0.0
    %148 = vmatpush1.msra.mxu0 0.0
    %149 = vmatprep.subr.mxu0 0.0
    %150 = vmatpush1.msra.mxu0 0.0
    %151 = vmatprep.subr.mxu0 0.0
    %152 = vmatpush1.msra.mxu0 0.0
    %153 = vmatprep.subr.mxu0 0.0
    %154 = vmatpush1.msra.mxu0 0.0
    %155 = vmatprep.subr.mxu0 0.0
    %156 = vmatpush1.msra.mxu0 0.0
    %157 = vmatprep.subr.mxu0 0.0
    %158 = vmatpush1.msra.mxu0 0.0
    %159 = vmatprep.subr.mxu0 0.0
    %160 = vmatpush1.msra.mxu0 0.0
    %161 = vmatprep.subr.mxu0 0.0
    %162 = vmatpush1.msra.mxu0 0.0
    %163 = vmatprep.subr.mxu0 0.0
    %164 = vmatpush1.msra.mxu0 0.0
    %165 = vmatprep.subr.mxu0 0.0
    %166 = vmatpush1.msra.mxu0 0.0
    %167 = vmatprep.subr.mxu0 0.0
    %168 = vmatpush1.msra.mxu0 0.0
    %169 = vmatprep.subr.mxu0 0.0
    %170 = vmatpush1.msra.mxu0 0.0
    %171 = vmatprep.subr.mxu0 0.0
    %172 = vmatpush1.msra.mxu0 0.0
    %173 = vmatprep.subr.mxu0 0.0
    %174 = vmatpush1.msra.mxu0 0.0
    %175 = vmatprep.subr.mxu0 0.0
    %176 = vmatpush1.msra.mxu0 0.0
    %177 = vmatprep.mubr.f32.mxu0 0.0
    %178 = vmatmul.mubr.f32.gmra.mrb[0].mxu0 %v111
    %v179 = vpop.f32.mrb[0].mxu0
    %v180 = vadd.f32 %v107, %v179
    %v181 = vpop.f32.mrb[0].mxu0
    %182 = vdwg.mxu0
    %v183 = vmax.f32 %v180, 0.0
    %v184 = vld [vmem:[#allocation7] sm:$0xff]
    %v185 = vld [vmem:[#allocation7 + $0x8] sm:$0xff]
    %v186 = vld [vmem:[#allocation7 + $0x10] sm:$0xff]
    %v187 = vld [vmem:[#allocation7 + $0x18] sm:$0xff]
    %v188 = vld [vmem:[#allocation7 + $0x20] sm:$0xff]
    %v189 = vld [vmem:[#allocation7 + $0x28] sm:$0xff]
    %v190 = vld [vmem:[#allocation7 + $0x30] sm:$0xff]
    %v191 = vld [vmem:[#allocation7 + $0x38] sm:$0xff]
    %v192 = vld [vmem:[%s4] sm:$0x1]
    %v194 = vlaneseq
    %v195 = vshrl.u32 %v194, 7
    %v196 = vsub.s32 0, %v195
    %v197 = vrot.slane %v192, %v196
    %vm199 = vcmask 523264
    %v201 = vsel %vm199, %v183, 0
    %203 = vmatprep.subr.mxu0 0.0
    %204 = vmatpush1.msra.mxu0 %v184
    %205 = vmatprep.subr.mxu0 0.0
    %206 = vmatpush1.msra.mxu0 %v185
    %207 = vmatprep.subr.mxu0 0.0
    %208 = vmatpush1.msra.mxu0 %v186
    %209 = vmatprep.subr.mxu0 0.0
    %210 = vmatpush1.msra.mxu0 %v187
    %211 = vmatprep.subr.mxu0 0.0
    %212 = vmatpush1.msra.mxu0 %v188
    %213 = vmatprep.subr.mxu0 0.0
    %214 = vmatpush1.msra.mxu0 %v189
    %215 = vmatprep.subr.mxu0 0.0
    %216 = vmatpush1.msra.mxu0 %v190
    %217 = vmatprep.subr.mxu0 0.0
    %218 = vmatpush1.msra.mxu0 %v191
    %219 = vmatprep.subr.mxu0 0.0
    %220 = vmatpush1.msra.mxu0 0.0
    %221 = vmatprep.subr.mxu0 0.0
    %222 = vmatpush1.msra.mxu0 0.0
    %223 = vmatprep.subr.mxu0 0.0
    %224 = vmatpush1.msra.mxu0 0.0
    %225 = vmatprep.subr.mxu0 0.0
    %226 = vmatpush1.msra.mxu0 0.0
    %227 = vmatprep.subr.mxu0 0.0
    %228 = vmatpush1.msra.mxu0 0.0
    %229 = vmatprep.subr.mxu0 0.0
    %230 = vmatpush1.msra.mxu0 0.0
    %231 = vmatprep.subr.mxu0 0.0
    %232 = vmatpush1.msra.mxu0 0.0
    %233 = vmatprep.subr.mxu0 0.0
    %234 = vmatpush1.msra.mxu0 0.0
    %235 = vmatprep.subr.mxu0 0.0
    %236 = vmatpush1.msra.mxu0 0.0
    %237 = vmatprep.subr.mxu0 0.0
    %238 = vmatpush1.msra.mxu0 0.0
    %239 = vmatprep.subr.mxu0 0.0
    %240 = vmatpush1.msra.mxu0 0.0
    %241 = vmatprep.subr.mxu0 0.0
    %242 = vmatpush1.msra.mxu0 0.0
    %243 = vmatprep.subr.mxu0 0.0
    %244 = vmatpush1.msra.mxu0 0.0
    %245 = vmatprep.subr.mxu0 0.0
    %246 = vmatpush1.msra.mxu0 0.0
    %247 = vmatprep.subr.mxu0 0.0
    %248 = vmatpush1.msra.mxu0 0.0
    %249 = vmatprep.subr.mxu0 0.0
    %250 = vmatpush1.msra.mxu0 0.0
    %251 = vmatprep.subr.mxu0 0.0
    %252 = vmatpush1.msra.mxu0 0.0
    %253 = vmatprep.subr.mxu0 0.0
    %254 = vmatpush1.msra.mxu0 0.0
    %255 = vmatprep.subr.mxu0 0.0
    %256 = vmatpush1.msra.mxu0 0.0
    %257 = vmatprep.subr.mxu0 0.0
    %258 = vmatpush1.msra.mxu0 0.0
    %259 = vmatprep.subr.mxu0 0.0
    %260 = vmatpush1.msra.mxu0 0.0
    %261 = vmatprep.subr.mxu0 0.0
    %262 = vmatpush1.msra.mxu0 0.0
    %263 = vmatprep.subr.mxu0 0.0
    %264 = vmatpush1.msra.mxu0 0.0
    %265 = vmatprep.subr.mxu0 0.0
    %266 = vmatpush1.msra.mxu0 0.0
    %267 = vmatprep.mubr.f32.mxu0 0.0
    %268 = vmatmul.mubr.f32.gmra.mrb[0].mxu0 %v201
    %v269 = vpop.f32.mrb[0].mxu0
    %v270 = vadd.f32 %v197, %v269
    %v271 = vpop.f32.mrb[0].mxu0
    %272 = vdwg.mxu0
    %v273 = vmax.f32 %v270, 0.0
    %v274 = vld [vmem:[#allocation8] sm:$0xff]
    %v275 = vld [vmem:[#allocation8 + $0x8] sm:$0xff]
    %v276 = vld [vmem:[#allocation8 + $0x10] sm:$0xff]
    %v277 = vld [vmem:[#allocation8 + $0x18] sm:$0xff]
    %v278 = vld [vmem:[#allocation8 + $0x20] sm:$0xff]
    %v279 = vld [vmem:[#allocation8 + $0x28] sm:$0xff]
    %v280 = vld [vmem:[#allocation8 + $0x30] sm:$0xff]
    %v281 = vld [vmem:[#allocation8 + $0x38] sm:$0xff]
    %v282 = vld [vmem:[%s6] sm:$0x1]
    %v284 = vlaneseq
    %v285 = vshrl.u32 %v284, 7
    %v286 = vsub.s32 0, %v285
    %v287 = vrot.slane %v282, %v286
    %v290 = vsel %vm199, %v273, 0
    %292 = vmatprep.subr.mxu0 0.0
    %293 = vmatpush1.msra.mxu0 %v274
    %294 = vmatprep.subr.mxu0 0.0
    %295 = vmatpush1.msra.mxu0 %v275
    %296 = vmatprep.subr.mxu0 0.0
    %297 = vmatpush1.msra.mxu0 %v276
    %298 = vmatprep.subr.mxu0 0.0
    %299 = vmatpush1.msra.mxu0 %v277
    %300 = vmatprep.subr.mxu0 0.0
    %301 = vmatpush1.msra.mxu0 %v278
    %302 = vmatprep.subr.mxu0 0.0
    %303 = vmatpush1.msra.mxu0 %v279
    %304 = vmatprep.subr.mxu0 0.0
    %305 = vmatpush1.msra.mxu0 %v280
    %306 = vmatprep.subr.mxu0 0.0
    %307 = vmatpush1.msra.mxu0 %v281
    %308 = vmatprep.subr.mxu0 0.0
    %309 = vmatpush1.msra.mxu0 0.0
    %310 = vmatprep.subr.mxu0 0.0
    %311 = vmatpush1.msra.mxu0 0.0
    %312 = vmatprep.subr.mxu0 0.0
    %313 = vmatpush1.msra.mxu0 0.0
    %314 = vmatprep.subr.mxu0 0.0
    %315 = vmatpush1.msra.mxu0 0.0
    %316 = vmatprep.subr.mxu0 0.0
    %317 = vmatpush1.msra.mxu0 0.0
    %318 = vmatprep.subr.mxu0 0.0
    %319 = vmatpush1.msra.mxu0 0.0
    %320 = vmatprep.subr.mxu0 0.0
    %321 = vmatpush1.msra.mxu0 0.0
    %322 = vmatprep.subr.mxu0 0.0
    %323 = vmatpush1.msra.mxu0 0.0
    %324 = vmatprep.subr.mxu0 0.0
    %325 = vmatpush1.msra.mxu0 0.0
    %326 = vmatprep.subr.mxu0 0.0
    %327 = vmatpush1.msra.mxu0 0.0
    %328 = vmatprep.subr.mxu0 0.0
    %329 = vmatpush1.msra.mxu0 0.0
    %330 = vmatprep.subr.mxu0 0.0
    %331 = vmatpush1.msra.mxu0 0.0
    %332 = vmatprep.subr.mxu0 0.0
    %333 = vmatpush1.msra.mxu0 0.0
    %334 = vmatprep.subr.mxu0 0.0
    %335 = vmatpush1.msra.mxu0 0.0
    %336 = vmatprep.subr.mxu0 0.0
    %337 = vmatpush1.msra.mxu0 0.0
    %338 = vmatprep.subr.mxu0 0.0
    %339 = vmatpush1.msra.mxu0 0.0
    %340 = vmatprep.subr.mxu0 0.0
    %341 = vmatpush1.msra.mxu0 0.0
    %342 = vmatprep.subr.mxu0 0.0
    %343 = vmatpush1.msra.mxu0 0.0
    %344 = vmatprep.subr.mxu0 0.0
    %345 = vmatpush1.msra.mxu0 0.0
    %346 = vmatprep.subr.mxu0 0.0
    %347 = vmatpush1.msra.mxu0 0.0
    %348 = vmatprep.subr.mxu0 0.0
    %349 = vmatpush1.msra.mxu0 0.0
    %350 = vmatprep.subr.mxu0 0.0
    %351 = vmatpush1.msra.mxu0 0.0
    %352 = vmatprep.subr.mxu0 0.0
    %353 = vmatpush1.msra.mxu0 0.0
    %354 = vmatprep.subr.mxu0 0.0
    %355 = vmatpush1.msra.mxu0 0.0
    %356 = vmatprep.mubr.f32.mxu0 0.0
    %357 = vmatmul.mubr.f32.gmra.mrb[0].mxu0 %v290
    %v358 = vpop.f32.mrb[0].mxu0
    %v359 = vadd.f32 %v287, %v358
    %v360 = vpop.f32.mrb[0].mxu0
    %361 = vdwg.mxu0
    %v362 = vmax.f32 %v359, 0.0
    %v363 = vld [vmem:[#allocation10] sm:$0xff]
    %v364 = vld [vmem:[#allocation10 + $0x8] sm:$0xff]
    %v365 = vld [vmem:[#allocation10 + $0x10] sm:$0xff]
    %v366 = vld [vmem:[#allocation10 + $0x18] sm:$0xff]
    %v367 = vld [vmem:[#allocation10 + $0x20] sm:$0xff]
    %v368 = vld [vmem:[#allocation10 + $0x28] sm:$0xff]
    %v369 = vld [vmem:[#allocation10 + $0x30] sm:$0xff]
    %v370 = vld [vmem:[#allocation10 + $0x38] sm:$0xff]
    %v371 = vld [vmem:[%s8] sm:$0x1]
    %v373 = vlaneseq
    %v374 = vshrl.u32 %v373, 7
    %v375 = vsub.s32 0, %v374
    %v376 = vrot.slane %v371, %v375
    %v379 = vsel %vm199, %v362, 0
    %381 = vmatprep.subr.mxu0 0.0
    %382 = vmatpush1.msra.mxu0 %v363
    %383 = vmatprep.subr.mxu0 0.0
    %384 = vmatpush1.msra.mxu0 %v364
    %385 = vmatprep.subr.mxu0 0.0
    %386 = vmatpush1.msra.mxu0 %v365
    %387 = vmatprep.subr.mxu0 0.0
    %388 = vmatpush1.msra.mxu0 %v366
    %389 = vmatprep.subr.mxu0 0.0
    %390 = vmatpush1.msra.mxu0 %v367
    %391 = vmatprep.subr.mxu0 0.0
    %392 = vmatpush1.msra.mxu0 %v368
    %393 = vmatprep.subr.mxu0 0.0
    %394 = vmatpush1.msra.mxu0 %v369
    %395 = vmatprep.subr.mxu0 0.0
    %396 = vmatpush1.msra.mxu0 %v370
    %397 = vmatprep.subr.mxu0 0.0
    %398 = vmatpush1.msra.mxu0 0.0
    %399 = vmatprep.subr.mxu0 0.0
    %400 = vmatpush1.msra.mxu0 0.0
    %401 = vmatprep.subr.mxu0 0.0
    %402 = vmatpush1.msra.mxu0 0.0
    %403 = vmatprep.subr.mxu0 0.0
    %404 = vmatpush1.msra.mxu0 0.0
    %405 = vmatprep.subr.mxu0 0.0
    %406 = vmatpush1.msra.mxu0 0.0
    %407 = vmatprep.subr.mxu0 0.0
    %408 = vmatpush1.msra.mxu0 0.0
    %409 = vmatprep.subr.mxu0 0.0
    %410 = vmatpush1.msra.mxu0 0.0
    %411 = vmatprep.subr.mxu0 0.0
    %412 = vmatpush1.msra.mxu0 0.0
    %413 = vmatprep.subr.mxu0 0.0
    %414 = vmatpush1.msra.mxu0 0.0
    %415 = vmatprep.subr.mxu0 0.0
    %416 = vmatpush1.msra.mxu0 0.0
    %417 = vmatprep.subr.mxu0 0.0
    %418 = vmatpush1.msra.mxu0 0.0
    %419 = vmatprep.subr.mxu0 0.0
    %420 = vmatpush1.msra.mxu0 0.0
    %421 = vmatprep.subr.mxu0 0.0
    %422 = vmatpush1.msra.mxu0 0.0
    %423 = vmatprep.subr.mxu0 0.0
    %424 = vmatpush1.msra.mxu0 0.0
    %425 = vmatprep.subr.mxu0 0.0
    %426 = vmatpush1.msra.mxu0 0.0
    %427 = vmatprep.subr.mxu0 0.0
    %428 = vmatpush1.msra.mxu0 0.0
    %429 = vmatprep.subr.mxu0 0.0
    %430 = vmatpush1.msra.mxu0 0.0
    %431 = vmatprep.subr.mxu0 0.0
    %432 = vmatpush1.msra.mxu0 0.0
    %433 = vmatprep.subr.mxu0 0.0
    %434 = vmatpush1.msra.mxu0 0.0
    %435 = vmatprep.subr.mxu0 0.0
    %436 = vmatpush1.msra.mxu0 0.0
    %437 = vmatprep.subr.mxu0 0.0
    %438 = vmatpush1.msra.mxu0 0.0
    %439 = vmatprep.subr.mxu0 0.0
    %440 = vmatpush1.msra.mxu0 0.0
    %441 = vmatprep.subr.mxu0 0.0
    %442 = vmatpush1.msra.mxu0 0.0
    %443 = vmatprep.subr.mxu0 0.0
    %444 = vmatpush1.msra.mxu0 0.0
    %445 = vmatprep.mubr.f32.mxu0 0.0
    %446 = vmatmul.mubr.f32.gmra.mrb[0].mxu0 %v379
    %v447 = vpop.f32.mrb[0].mxu0
    %v448 = vadd.f32 %v376, %v447
    %v449 = vpop.f32.mrb[0].mxu0
    %450 = vdwg.mxu0
    %451 = vst [vmem:[#allocation11] sm:$0xff] %v448
    // Predicated region
    $region58: #{tpu_custom_call.1} parent=1 // pred_check
      _
    $region59: #{tpu_custom_call.1} parent=1 // pred_check_branch
      %453 = sbr.rel (0) target = $region61
    $region60: #{tpu_custom_call.1} parent=1 // pred_region
      %s455 = ssub.s32 128, 128
      %456 = vsyncadd [#allocation4], %s455
      %s458 = sshll.u32 [#allocation11], 4
      %s459 = int_to_ptr.vmem [resolvable:$true] %s458
      %461 = dma.vmem_to_hbm [thread:$0]  %s459, 128, %s9, [#allocation4]
    $region61: #{tpu_custom_call.1} parent=1 // pred_fallthru
      _
    // Predicated region
    $region62: #{tpu_custom_call.1} parent=1 // pred_check
      _
    $region63: #{tpu_custom_call.1} parent=1 // pred_check_branch
      %463 = sbr.rel (0) target = $region65
    $region64: #{tpu_custom_call.1} parent=1 // pred_region
      %464 = dma.done [#allocation4], 128
    $region65: #{tpu_custom_call.1} parent=1 // pred_fallthru
      _
    %465 = vsyncpa [#allocation3], 1
    %466 = vsyncpa [#allocation6], 1
    %467 = vsyncpa [#allocation9], 1
    %468 = vsyncpa [#allocation4], 1

</llo_original>
